<compile_context>
chip_gen: v7x
topology: tpu7x:2x2x1
jax: 0.10.0
libtpu: 0.0.40
codegen_flags: <defaults>
</compile_context>

<pallas_src>
import jax
import jax.numpy as jnp
import numpy as np
from jax.experimental import pallas as pl
from jax.experimental.pallas import tpu as pltpu


def _relu(v):
    return jnp.maximum(v, 0.0)


def _round_up(n, m):
    return -(-n // m) * m


# ----------------------------------------------------------------------------- kernel
def feature_agg_att_kernel(x_ref, feats_ref, w_init_ref, w_feat_ref,
                           w_att_a_ref, w_att_b_ref, w_agg_ref, o_ref):
    f32 = jnp.float32
    cdt = x_ref.dtype                       # compute/stream dtype (bf16 or f32)

    x = x_ref[...]                          # (TN, D)
    feats = feats_ref[...]                  # (F, TN, D)
    F, TN, D = feats.shape
    Dout = o_ref.shape[-1]

    # activation(init_lin(x)).  The reference applies ReLU twice on this path
    # (before and after the concat); ReLU is idempotent -> one suffices.
    a_init = _relu(jnp.dot(x, w_init_ref[...],
                           preferred_element_type=f32))                    # (TN, D)

    # activation(bmm(feat_stack, feat_lin)) -- per-feature weights (F small).
    a_feats = _relu(jnp.einsum('fnd,fde->fne', feats, w_feat_ref[...],
                               preferred_element_type=f32))                # (F, TN, D)

    # e[f] = a_init @ w_att[:D] + a_feats[f] @ w_att[D:]
    # (== att(cat([relu(lin_init), relu(lin_feats)], -1)) with the weight split).
    # Flatten (F,TN,D)->(F*TN,D): one large MXU matmul instead of F small ones;
    # the reshape is sublane-contiguous since TN % 8 == 0.
    e_feat = jnp.dot(a_feats.reshape(F * TN, D).astype(cdt), w_att_b_ref[...],
                     preferred_element_type=f32).reshape(F, TN, Dout)
    e_init = jnp.dot(a_init.astype(cdt), w_att_a_ref[...],
                     preferred_element_type=f32)                           # (TN, Dout)
    e = e_feat + e_init[None, :, :]                                        # (F, TN, Dout)

    # softmax over the feature axis (torch.softmax(e, dim=0)) with the
    # normalization folded AFTER the feature reduction; exact divide.
    m = jnp.max(e, axis=0, keepdims=True)
    p = jnp.exp(e - m)                                                     # (F, TN, Dout)
    denom = jnp.sum(p, axis=0)                                             # (TN, Dout)
    s = jnp.sum(p * feats.astype(f32), axis=0)                             # (TN, D); Dout == D
    att = s / denom                                                        # (TN, D)

    # agg_lin(att)
    o_ref[...] = jnp.dot(att.astype(cdt), w_agg_ref[...],
                         preferred_element_type=f32).astype(o_ref.dtype)


# ----------------------------------------------------------------------------- wrapper
def _vmem_capacity_bytes():
    """Physical VMEM on this generation; conservative (v7x) fallback."""
    try:
        cap = getattr(pltpu.get_tpu_info(), "vmem_capacity_bytes", None)
        if cap:
            return int(cap)
    except Exception:
        pass
    return 64 * 1024 * 1024


def _row_tile_cap(D, Dout, F, itemsize, budget_bytes):
    """Max rows per grid step under `budget_bytes`, using lane-padded widths
    for every buffer and including the resident (double-buffered) weights."""
    dp = _round_up(D, 128)          # lane-padded feature width
    dop = _round_up(Dout, 128)      # lane-padded output width
    # Resident weights (double-buffered by the pipeline even with a constant
    # index map): w_init, w_feat, w_att_a, w_att_b, w_agg.
    weight_bytes = 2 * itemsize * (D * dp + F * D * dp + 2 * D * dop + D * dop)
    # Per-row bytes: pipelined HBM tiles (x, feats double-buffered; f32 out
    # double-buffered) plus the f32 in-kernel intermediates (conservative:
    # counts a_init/a_feats, the e/p stack, softmax scalars, the f32 feats
    # copy for the weighted sum, and the result).
    per_row = (2 * itemsize * (F * dp + dp) + 2 * 4 * dop
               + 4 * ((3 * F + 2) * dp + (3 * F + 5) * dop))
    avail = max(budget_bytes - weight_bytes, 8 * per_row)
    return max(8, (avail // per_row) // 8 * 8)


def feature_aggregation_att(x, feats, w_init, w_feat, w_att, w_agg, *,
                            tn=4096,
                            compute_dtype=jnp.bfloat16):
    """x:(N,D), feats:(F,N,D), w_init:(D,D), w_feat:(F,D,D),
    w_att:(2D,Dout), w_agg:(D,Dout) -> (N,Dout) float32.

    compute_dtype controls the HBM-stream / MXU-operand dtype; accumulation
    is always f32.  Default bfloat16 (kernel is HBM-bound); pass jnp.float32
    for tighter numerics."""
    N, D = x.shape
    F = feats.shape[0]
    Dout = w_agg.shape[1]
    # 'att' mode requires Dout == D (enforced by einsum('fnd,fnd->nd') in ref)
    assert Dout == D, "att mode requires out_channels == in_channels"

    cd = jnp.dtype(compute_dtype)
    itemsize = cd.itemsize

    # --- per-generation VMEM limits & row-tile selection ----------------------
    vmem_phys = _vmem_capacity_bytes()
    # ~96 MiB on v5e/v6e (128 MiB physical), ~48 MiB on v7x (64 MiB physical).
    vmem_limit = int(min(100 * 1024 * 1024, (vmem_phys * 3) // 4))
    vmem_budget = vmem_limit // 2                       # headroom for the pipeline

    n_pad8 = _round_up(N, 8)
    tn_cap = _row_tile_cap(D, Dout, F, itemsize, vmem_budget)
    # >= 2 grid steps whenever possible so both v7x TensorCores get work.
    two_core_cap = max(8, _round_up(-(-n_pad8 // 2), 8))
    tn_req = max(8, (max(int(tn), 8) // 8) * 8)
    tn_eff = max(8, min(tn_req, tn_cap, two_core_cap, n_pad8))
    n_padded = _round_up(n_pad8, tn_eff)

    # --- pad rows so the grid tiles evenly (zero rows -> zero outputs) -------
    if n_padded != N:
        pad = n_padded - N
        x = jnp.pad(x, ((0, pad), (0, 0)))
        feats = jnp.pad(feats, ((0, 0), (0, pad), (0, 0)))

    x = x.astype(cd)
    feats = feats.astype(cd)
    w_init = w_init.astype(cd)
    w_feat = w_feat.astype(cd)
    w_att_a = w_att[:D].astype(cd)     # half multiplying activation(lin_init)
    w_att_b = w_att[D:].astype(cd)     # half multiplying activation(lin_feats)
    w_agg = w_agg.astype(cd)

    # NOTE: pipeline_mode=pl.Buffered(1) on the constant-index weight specs
    # would halve their (tiny at D=32) footprint; skipped here — negligible at
    # this width and the tile budget already reserves their double buffers.
    # TODO(synk): for Dout < 128 in production, present a lane-dense output
    # slab ((n*Dout/128, 128) view) if the in-kernel relayout cost pays off.
    grid = (n_padded // tn_eff,)
    out = pl.pallas_call(
        feature_agg_att_kernel,
        out_shape=jax.ShapeDtypeStruct((n_padded, Dout), jnp.float32),
        grid=grid,
        in_specs=[
            pl.BlockSpec((tn_eff, D), lambda i: (i, 0)),          # x tile
            pl.BlockSpec((F, tn_eff, D), lambda i: (0, i, 0)),    # feats tile
            pl.BlockSpec((D, D), lambda i: (0, 0)),               # w_init (full)
            pl.BlockSpec((F, D, D), lambda i: (0, 0, 0)),         # w_feat (full)
            pl.BlockSpec((D, Dout), lambda i: (0, 0)),            # w_att first half
            pl.BlockSpec((D, Dout), lambda i: (0, 0)),            # w_att second half
            pl.BlockSpec((D, Dout), lambda i: (0, 0)),            # w_agg (full)
        ],
        out_specs=pl.BlockSpec((tn_eff, Dout), lambda i: (i, 0)),
        compiler_params=pltpu.CompilerParams(
            dimension_semantics=("parallel",),      # shard the row axis across TCs
            vmem_limit_bytes=vmem_limit),
    )(x, feats, w_init, w_feat, w_att_a, w_att_b, w_agg)
    return out[:N]


# ----------------------------------------------------------------------------- reference
def feature_aggregation_att_ref(x, feats, w_init, w_feat, w_att, w_agg):
    """Pure-JAX reference mirroring the PyTorch forward (mode='att', ReLU)."""
    lin_init = jnp.broadcast_to((x @ w_init)[None], feats.shape)      # repeat(F,1,1)
    lin_feats = jnp.einsum('fnd,fde->fne', feats, w_feat)             # bmm
    cat = jnp.concatenate([_relu(lin_init), _relu(lin_feats)], axis=2)
    e = _relu(cat) @ w_att
    a = jax.nn.softmax(e, axis=0)
    att = jnp.einsum('fnd,fnd->nd', a, feats)
    return att @ w_agg


if __name__ == "__main__":
    N, D, F = 16, 32, 3
    Dout = D  # required by the einsum in 'att' mode

    key = jax.random.PRNGKey(0)
    ks = jax.random.split(key, 6)

    def xavier(k, shape, fan_in, fan_out):
        return (jax.random.normal(k, shape, jnp.float32)
                * np.sqrt(2.0 / (fan_in + fan_out)))

    x = jax.random.normal(ks[0], (N, D), jnp.float32)
    feats = jax.random.normal(ks[1], (F, N, D), jnp.float32)

    # Linear weights stored as (in, out)  (== torch weight.T)
    w_init = xavier(ks[2], (D, D), D, D)
    w_feat = xavier(ks[3], (F, D, D), D, D)
    w_att = xavier(ks[4], (2 * D, Dout), 2 * D, Dout)
    w_agg = xavier(ks[5], (D, Dout), D, Dout)

    ref = feature_aggregation_att_ref(x, feats, w_init, w_feat, w_att, w_agg)

    # Default path: bf16 streams (HBM-bound kernel) -- bf16-level tolerance.
    out_bf16 = feature_aggregation_att(x, feats, w_init, w_feat, w_att, w_agg)
    out_bf16 = jax.block_until_ready(out_bf16)
    np.testing.assert_allclose(np.asarray(out_bf16), np.asarray(ref),
                               rtol=5e-2, atol=5e-2)

    # f32 path (exact softmax divide, f32 streams) -- tighter tolerance.
    out_f32 = feature_aggregation_att(x, feats, w_init, w_feat, w_att, w_agg,
                                      compute_dtype=jnp.float32)
    out_f32 = jax.block_until_ready(out_f32)
    np.testing.assert_allclose(np.asarray(out_f32), np.asarray(ref),
                               rtol=1e-2, atol=1e-2)

    # TODO(synk): 'sum' / 'max' / 'concat' modes are trivial (reduce + one
    # matmul) and omitted; only the default 'att' mode is implemented here.
    print("KERNEL_OK")
</pallas_src>

<mosaic_0001>
module attributes {stable_mosaic.version = 11 : i64} {
  func.func @feature_agg_att_kernel(%arg0: i32, %arg1: memref<8x32xbf16, #tpu.memory_space<vmem>>, %arg2: memref<3x8x32xbf16, #tpu.memory_space<vmem>>, %arg3: memref<32x32xbf16, #tpu.memory_space<vmem>>, %arg4: memref<3x32x32xbf16, #tpu.memory_space<vmem>>, %arg5: memref<32x32xbf16, #tpu.memory_space<vmem>>, %arg6: memref<32x32xbf16, #tpu.memory_space<vmem>>, %arg7: memref<32x32xbf16, #tpu.memory_space<vmem>>, %arg8: memref<8x32xf32, #tpu.memory_space<vmem>>) attributes {dimension_semantics = [#tpu.dimension_semantics<parallel>], iteration_bounds = array<i64: 2>, scalar_prefetch = 0 : i64, scratch_operands = 0 : i64, tpu.core_type = #tpu.core_type<tc>, window_params = [{transform_indices = @transform_0, window_bounds = array<i64: 8, 32>}, {transform_indices = @transform_1, window_bounds = array<i64: 3, 8, 32>}, {pipeline_mode = #tpu.pipeline_mode<synchronous>, transform_indices = @transform_2, window_bounds = array<i64: 32, 32>}, {pipeline_mode = #tpu.pipeline_mode<synchronous>, transform_indices = @transform_3, window_bounds = array<i64: 3, 32, 32>}, {pipeline_mode = #tpu.pipeline_mode<synchronous>, transform_indices = @transform_4, window_bounds = array<i64: 32, 32>}, {pipeline_mode = #tpu.pipeline_mode<synchronous>, transform_indices = @transform_5, window_bounds = array<i64: 32, 32>}, {pipeline_mode = #tpu.pipeline_mode<synchronous>, transform_indices = @transform_6, window_bounds = array<i64: 32, 32>}, {transform_indices = @transform_7, window_bounds = array<i64: 8, 32>}]} {
    %c0 = arith.constant 0 : index
    %c0_0 = arith.constant 0 : index
    %0 = vector.load %arg1[%c0, %c0_0] : memref<8x32xbf16, #tpu.memory_space<vmem>>, vector<8x32xbf16>
    %c0_1 = arith.constant 0 : index
    %c0_2 = arith.constant 0 : index
    %c0_3 = arith.constant 0 : index
    %1 = vector.load %arg2[%c0_1, %c0_2, %c0_3] : memref<3x8x32xbf16, #tpu.memory_space<vmem>>, vector<3x8x32xbf16>
    %c0_4 = arith.constant 0 : index
    %c0_5 = arith.constant 0 : index
    %2 = vector.load %arg3[%c0_4, %c0_5] : memref<32x32xbf16, #tpu.memory_space<vmem>>, vector<32x32xbf16>
    %cst = arith.constant dense<0.000000e+00> : vector<8x32xf32>
    %3 = tpu.matmul %0, %2, %cst {dimension_numbers = #tpu.dot_dimension_numbers<[1], [0], [0], [1], [0, 0, 1, 1], [], []>} : vector<8x32xbf16>, vector<32x32xbf16>, vector<8x32xf32> -> vector<8x32xf32>
    %cst_6 = arith.constant 0.000000e+00 : f32
    %4 = vector.broadcast %cst_6 : f32 to vector<8x32xf32>
    %5 = arith.maximumf %3, %4 : vector<8x32xf32>
    %c0_7 = arith.constant 0 : index
    %c0_8 = arith.constant 0 : index
    %c0_9 = arith.constant 0 : index
    %6 = vector.load %arg4[%c0_7, %c0_8, %c0_9] : memref<3x32x32xbf16, #tpu.memory_space<vmem>>, vector<3x32x32xbf16>
    "tpu.trace_start"() <{level = 10 : i32, message = "fnd,fde->fne"}> : () -> ()
    %cst_10 = arith.constant dense<0.000000e+00> : vector<3x8x32xf32>
    %7 = tpu.matmul %1, %6, %cst_10 {dimension_numbers = #tpu.dot_dimension_numbers<[2], [1], [1], [2], [0, 0, 0, 1, 1, 2], [0], [0]>} : vector<3x8x32xbf16>, vector<3x32x32xbf16>, vector<3x8x32xf32> -> vector<3x8x32xf32>
    "tpu.trace_stop"() : () -> ()
    %cst_11 = arith.constant 0.000000e+00 : f32
    %8 = vector.broadcast %cst_11 : f32 to vector<3x8x32xf32>
    %9 = arith.maximumf %7, %8 : vector<3x8x32xf32>
    %10 = vector.shape_cast %9 : vector<3x8x32xf32> to vector<24x32xf32>
    %11 = arith.truncf %10 : vector<24x32xf32> to vector<24x32xbf16>
    %c0_12 = arith.constant 0 : index
    %c0_13 = arith.constant 0 : index
    %12 = vector.load %arg6[%c0_12, %c0_13] : memref<32x32xbf16, #tpu.memory_space<vmem>>, vector<32x32xbf16>
    %cst_14 = arith.constant dense<0.000000e+00> : vector<24x32xf32>
    %13 = tpu.matmul %11, %12, %cst_14 {dimension_numbers = #tpu.dot_dimension_numbers<[1], [0], [0], [1], [0, 0, 1, 1], [], []>} : vector<24x32xbf16>, vector<32x32xbf16>, vector<24x32xf32> -> vector<24x32xf32>
    %14 = vector.shape_cast %13 : vector<24x32xf32> to vector<3x8x32xf32>
    %15 = arith.truncf %5 : vector<8x32xf32> to vector<8x32xbf16>
    %c0_15 = arith.constant 0 : index
    %c0_16 = arith.constant 0 : index
    %16 = vector.load %arg5[%c0_15, %c0_16] : memref<32x32xbf16, #tpu.memory_space<vmem>>, vector<32x32xbf16>
    %cst_17 = arith.constant dense<0.000000e+00> : vector<8x32xf32>
    %17 = tpu.matmul %15, %16, %cst_17 {dimension_numbers = #tpu.dot_dimension_numbers<[1], [0], [0], [1], [0, 0, 1, 1], [], []>} : vector<8x32xbf16>, vector<32x32xbf16>, vector<8x32xf32> -> vector<8x32xf32>
    %18 = vector.shape_cast %17 : vector<8x32xf32> to vector<1x8x32xf32>
    %19 = vector.broadcast %18 : vector<1x8x32xf32> to vector<3x8x32xf32>
    %20 = arith.addf %14, %19 : vector<3x8x32xf32>
    %cst_18 = arith.constant dense<0xFF800000> : vector<8x32xf32>
    %21 = vector.multi_reduction <maximumf>, %20, %cst_18 [0] : vector<3x8x32xf32> to vector<8x32xf32>
    %22 = vector.shape_cast %21 : vector<8x32xf32> to vector<1x8x32xf32>
    %23 = vector.broadcast %22 : vector<1x8x32xf32> to vector<3x8x32xf32>
    %24 = arith.subf %20, %23 : vector<3x8x32xf32>
    %25 = math.exp %24 : vector<3x8x32xf32>
    %cst_19 = arith.constant dense<0.000000e+00> : vector<8x32xf32>
    %26 = vector.multi_reduction <add>, %25, %cst_19 [0] : vector<3x8x32xf32> to vector<8x32xf32>
    %27 = arith.extf %1 : vector<3x8x32xbf16> to vector<3x8x32xf32>
    %28 = arith.mulf %25, %27 : vector<3x8x32xf32>
    %cst_20 = arith.constant dense<0.000000e+00> : vector<8x32xf32>
    %29 = vector.multi_reduction <add>, %28, %cst_20 [0] : vector<3x8x32xf32> to vector<8x32xf32>
    %30 = arith.divf %29, %26 : vector<8x32xf32>
    %31 = arith.truncf %30 : vector<8x32xf32> to vector<8x32xbf16>
    %c0_21 = arith.constant 0 : index
    %c0_22 = arith.constant 0 : index
    %32 = vector.load %arg7[%c0_21, %c0_22] : memref<32x32xbf16, #tpu.memory_space<vmem>>, vector<32x32xbf16>
    %cst_23 = arith.constant dense<0.000000e+00> : vector<8x32xf32>
    %33 = tpu.matmul %31, %32, %cst_23 {dimension_numbers = #tpu.dot_dimension_numbers<[1], [0], [0], [1], [0, 0, 1, 1], [], []>} : vector<8x32xbf16>, vector<32x32xbf16>, vector<8x32xf32> -> vector<8x32xf32>
    %c0_24 = arith.constant 0 : index
    %c0_25 = arith.constant 0 : index
    %34 = vector.load %arg8[%c0_24, %c0_25] : memref<8x32xf32, #tpu.memory_space<vmem>>, vector<8x32xf32>
    tpu.vector_store %arg8[%c0_24, %c0_25], %33 {strides = array<i32>} : memref<8x32xf32, #tpu.memory_space<vmem>>, vector<8x32xf32>,
    return
  }
  func.func @transform_0(%arg0: i32) -> (i32, i32) {
    %c0_i32 = arith.constant 0 : i32
    %c0_i32_0 = arith.constant 0 : i32
    return %arg0, %c0_i32 : i32, i32
  }
  func.func @transform_1(%arg0: i32) -> (i32, i32, i32) {
    %c0_i32 = arith.constant 0 : i32
    %c0_i32_0 = arith.constant 0 : i32
    %c0_i32_1 = arith.constant 0 : i32
    return %c0_i32, %arg0, %c0_i32_0 : i32, i32, i32
  }
  func.func @transform_2(%arg0: i32) -> (i32, i32) {
    %c0_i32 = arith.constant 0 : i32
    %c0_i32_0 = arith.constant 0 : i32
    %c0_i32_1 = arith.constant 0 : i32
    return %c0_i32, %c0_i32_0 : i32, i32
  }
  func.func @transform_3(%arg0: i32) -> (i32, i32, i32) {
    %c0_i32 = arith.constant 0 : i32
    %c0_i32_0 = arith.constant 0 : i32
    %c0_i32_1 = arith.constant 0 : i32
    %c0_i32_2 = arith.constant 0 : i32
    return %c0_i32, %c0_i32_0, %c0_i32_1 : i32, i32, i32
  }
  func.func @transform_4(%arg0: i32) -> (i32, i32) {
    %c0_i32 = arith.constant 0 : i32
    %c0_i32_0 = arith.constant 0 : i32
    %c0_i32_1 = arith.constant 0 : i32
    return %c0_i32, %c0_i32_0 : i32, i32
  }
  func.func @transform_5(%arg0: i32) -> (i32, i32) {
    %c0_i32 = arith.constant 0 : i32
    %c0_i32_0 = arith.constant 0 : i32
    %c0_i32_1 = arith.constant 0 : i32
    return %c0_i32, %c0_i32_0 : i32, i32
  }
  func.func @transform_6(%arg0: i32) -> (i32, i32) {
    %c0_i32 = arith.constant 0 : i32
    %c0_i32_0 = arith.constant 0 : i32
    %c0_i32_1 = arith.constant 0 : i32
    return %c0_i32, %c0_i32_0 : i32, i32
  }
  func.func @transform_7(%arg0: i32) -> (i32, i32) {
    %c0_i32 = arith.constant 0 : i32
    %c0_i32_0 = arith.constant 0 : i32
    return %arg0, %c0_i32 : i32, i32
  }
}

</mosaic_0001>

<llo_original>
// kernel: tpu_custom_call.1
$region0: #{tpu_custom_call.1}
  #allocation0 [shape = 'u32[]', space=smem, size = 0x4, offset = 0x4, fixed_abs, tag = 'smem constant byte address 0x4 - core index']
  #allocation1 [shape = 'u32[144,128]{1,0:T(1,128)}', space=vmem, size = 0x12000, scoped, tag = 'internal scratch']
  %s0 = inlined_call_operand.hbm [shape: bf16[16,32], index: 0, kind: input, shape index: {}]
  %s1 = inlined_call_operand.hbm [shape: bf16[3,16,32], index: 1, kind: input, shape index: {}]
  %s2 = inlined_call_operand.hbm [shape: bf16[32,32], index: 2, kind: input, shape index: {}]
  %s3 = inlined_call_operand.hbm [shape: bf16[3,32,32], index: 3, kind: input, shape index: {}]
  %s4 = inlined_call_operand.hbm [shape: bf16[32,32], index: 4, kind: input, shape index: {}]
  %s5 = inlined_call_operand.vmem [shape: bf16[32,32], index: 5, kind: input, shape index: {}]
  %s6 = inlined_call_operand.hbm [shape: bf16[32,32], index: 6, kind: input, shape index: {}]
  %s7 = inlined_call_operand.hbm [shape: f32[16,32], index: 7, kind: output, shape index: {}]
  %s8 = sld [smem:[#allocation0]]
  $region85: #{tpu_custom_call.1} parent=0
    _
  %s10 = ssub.s32 1, %s8
  %s11 = scalar_select 0, %s10, %s8
  $region1: #{tpu_custom_call.1} parent=0
    #allocation2 [shape = 'u8[4096]{0}', space=vmem, size = 0x1000, scoped, tag = 'input window, operand 0']
    #allocation3 [shape = 's32[2]{0}', space=sflag, size = 0x8, scoped, tag = 'scoped memory for tpu_custom_call.1']
    #allocation4 [shape = 's32[2]{0}', space=sflag, size = 0x8, scoped, tag = 'scoped memory for tpu_custom_call.1']
    #allocation5 [shape = 'u8[12288]{0}', space=vmem, size = 0x3000, scoped, tag = 'input window, operand 1']
    #allocation6 [shape = 's32[2]{0}', space=sflag, size = 0x8, scoped, tag = 'scoped memory for tpu_custom_call.1']
    #allocation7 [shape = 'u8[8192]{0}', space=vmem, size = 0x2000, scoped, tag = 'input window, operand 2, single buffered']
    #allocation8 [shape = 'u8[24576]{0}', space=vmem, size = 0x6000, scoped, tag = 'input window, operand 3, single buffered']
    #allocation9 [shape = 's32[1]{0}', space=sflag, size = 0x4, scoped, tag = 'scoped memory for tpu_custom_call.1']
    #allocation10 [shape = 'u8[8192]{0}', space=vmem, size = 0x2000, scoped, tag = 'input window, operand 4, single buffered']
    #allocation11 [shape = 'u8[8192]{0}', space=vmem, size = 0x2000, scoped, tag = 'input window, operand 6, single buffered']
    #allocation12 [shape = 's32[1]{0}', space=sflag, size = 0x4, scoped, tag = 'scoped memory for tpu_custom_call.1']
    #allocation13 [shape = 'u8[8192]{0}', space=vmem, size = 0x2000, scoped, tag = 'output window, operand 0']
    %12 = vsyncpa [#allocation3], 0
    %s13 = scalar_lea.sflag [#allocation3], 1
    %14 = vsyncpa %s13, 0
    %15 = vsyncpa [#allocation6], 0
    %s16 = scalar_lea.sflag [#allocation6], 1
    %17 = vsyncpa %s16, 0
    %18 = vsyncpa [#allocation9], 0
    %19 = vsyncpa [#allocation12], 0
    %20 = vsyncpa [#allocation4], 0
    %s21 = scalar_lea.sflag [#allocation4], 1
    %22 = vsyncpa %s21, 0
    loop: start=0, step=1, limit=4
    $region2: #{tpu_custom_call.1} parent=1 // loop_pre_header
      _
    $region3: #{tpu_custom_call.1} parent=1 // loop_header
      %s24 = sphi 0, %s28
      %p25 = scmp.ge.s32.totalorder %s24, 4
      %s34 = sphi 0, %s36
      %s37 = sphi 0, %s34
      %s38 = sphi 0, %s37
      %s54 = sphi 0, %s38
      %s60 = sphi 0, %s62
      %s63 = sphi 0, %s60
      %s64 = sphi 0, %s63
      %s80 = sphi 0, %s64
      %s84 = sphi 0, %s84
      %s86 = sphi 0, %s84
      %s87 = sphi 0, %s86
      %s101 = sphi 0, %s87
      %s105 = sphi 0, %s105
      %s107 = sphi 0, %s105
      %s108 = sphi 0, %s107
      %s122 = sphi 0, %s108
      %s126 = sphi 0, %s126
      %s128 = sphi 0, %s126
      %s129 = sphi 0, %s128
      %s143 = sphi 0, %s129
      %s147 = sphi 0, %s147
      %s149 = sphi 0, %s147
      %s150 = sphi 0, %s149
      %s164 = sphi 0, %s150
      %s168 = sphi 0, %s168
      %s170 = sphi 0, %s168
      %s171 = sphi 0, %s170
      %s185 = sphi 0, %s171
      %s191 = sphi 0, %s193
      %s194 = sphi 0, %s191
      %s195 = sphi 0, %s194
      %s211 = sphi 0, %s195
    $region4: #{tpu_custom_call.1} parent=1 // loop_header_branch
      %27 = sbr.rel (%p25) target = $region8
    $region5: #{tpu_custom_call.1} parent=1 // loop_body
      %s29 = ssub.s32 %s24, 1
      %s30 = ssub.s32 %s24, 2
      %s31 = sadd.s32 %s24, 1
      %s32 = ssub.s32 %s24, %s31
      %p33 = scmp.eq.s32.totalorder %s32, 0
      %s35 = sadd.s32 %s34, 1
      %s36 = scalar_select %p33, %s34, %s35
      %p39 = pneg %p33
      %p40 = scmp.eq.s32.totalorder %s24, 1
      %p41 = por %p39, %p40
      %p42 = scmp.ne.s32.totalorder %s34, %s37
      %p43 = scmp.eq.s32.totalorder %s24, 0
      %p44 = por %p42, %p43
      %p45 = scmp.ne.s32.totalorder %s34, %s37
      %p46 = scmp.eq.s32.totalorder %s29, 1
      %p47 = por %p45, %p46
      %p48 = scmp.ne.s32.totalorder %s37, %s38
      %p49 = scmp.eq.s32.totalorder %s29, 0
      %p50 = por %p48, %p49
      %p51 = scmp.ne.s32.totalorder %s37, %s38
      %p52 = scmp.eq.s32.totalorder %s30, 1
      %p53 = por %p51, %p52
      %p55 = scmp.ne.s32.totalorder %s38, %s54
      %p56 = scmp.eq.s32.totalorder %s30, 0
      %p57 = por %p55, %p56
      %s58 = ssub.s32 %s24, %s31
      %p59 = scmp.eq.s32.totalorder %s58, 0
      %s61 = sadd.s32 %s60, 1
      %s62 = scalar_select %p59, %s60, %s61
      %p65 = pneg %p59
      %p66 = scmp.eq.s32.totalorder %s24, 1
      %p67 = por %p65, %p66
      %p68 = scmp.ne.s32.totalorder %s60, %s63
      %p69 = scmp.eq.s32.totalorder %s24, 0
      %p70 = por %p68, %p69
      %p71 = scmp.ne.s32.totalorder %s60, %s63
      %p72 = scmp.eq.s32.totalorder %s29, 1
      %p73 = por %p71, %p72
      %p74 = scmp.ne.s32.totalorder %s63, %s64
      %p75 = scmp.eq.s32.totalorder %s29, 0
      %p76 = por %p74, %p75
      %p77 = scmp.ne.s32.totalorder %s63, %s64
      %p78 = scmp.eq.s32.totalorder %s30, 1
      %p79 = por %p77, %p78
      %p81 = scmp.ne.s32.totalorder %s64, %s80
      %p82 = scmp.eq.s32.totalorder %s30, 0
      %p83 = por %p81, %p82
      %s85 = sadd.s32 %s84, 1
      %p88 = scmp.eq.s32.totalorder %s24, 1
      %p89 = scmp.ne.s32.totalorder %s84, %s86
      %p90 = scmp.eq.s32.totalorder %s24, 0
      %p91 = por %p89, %p90
      %p92 = scmp.ne.s32.totalorder %s84, %s86
      %p93 = scmp.eq.s32.totalorder %s29, 1
      %p94 = por %p92, %p93
      %p95 = scmp.ne.s32.totalorder %s86, %s87
      %p96 = scmp.eq.s32.totalorder %s29, 0
      %p97 = por %p95, %p96
      %p98 = scmp.ne.s32.totalorder %s86, %s87
      %p99 = scmp.eq.s32.totalorder %s30, 1
      %p100 = por %p98, %p99
      %p102 = scmp.ne.s32.totalorder %s87, %s101
      %p103 = scmp.eq.s32.totalorder %s30, 0
      %p104 = por %p102, %p103
      %s106 = sadd.s32 %s105, 1
      %p109 = scmp.eq.s32.totalorder %s24, 1
      %p110 = scmp.ne.s32.totalorder %s105, %s107
      %p111 = scmp.eq.s32.totalorder %s24, 0
      %p112 = por %p110, %p111
      %p113 = scmp.ne.s32.totalorder %s105, %s107
      %p114 = scmp.eq.s32.totalorder %s29, 1
      %p115 = por %p113, %p114
      %p116 = scmp.ne.s32.totalorder %s107, %s108
      %p117 = scmp.eq.s32.totalorder %s29, 0
      %p118 = por %p116, %p117
      %p119 = scmp.ne.s32.totalorder %s107, %s108
      %p120 = scmp.eq.s32.totalorder %s30, 1
      %p121 = por %p119, %p120
      %p123 = scmp.ne.s32.totalorder %s108, %s122
      %p124 = scmp.eq.s32.totalorder %s30, 0
      %p125 = por %p123, %p124
      %s127 = sadd.s32 %s126, 1
      %p130 = scmp.eq.s32.totalorder %s24, 1
      %p131 = scmp.ne.s32.totalorder %s126, %s128
      %p132 = scmp.eq.s32.totalorder %s24, 0
      %p133 = por %p131, %p132
      %p134 = scmp.ne.s32.totalorder %s126, %s128
      %p135 = scmp.eq.s32.totalorder %s29, 1
      %p136 = por %p134, %p135
      %p137 = scmp.ne.s32.totalorder %s128, %s129
      %p138 = scmp.eq.s32.totalorder %s29, 0
      %p139 = por %p137, %p138
      %p140 = scmp.ne.s32.totalorder %s128, %s129
      %p141 = scmp.eq.s32.totalorder %s30, 1
      %p142 = por %p140, %p141
      %p144 = scmp.ne.s32.totalorder %s129, %s143
      %p145 = scmp.eq.s32.totalorder %s30, 0
      %p146 = por %p144, %p145
      %s148 = sadd.s32 %s147, 1
      %p151 = scmp.eq.s32.totalorder %s24, 1
      %p152 = scmp.ne.s32.totalorder %s147, %s149
      %p153 = scmp.eq.s32.totalorder %s24, 0
      %p154 = por %p152, %p153
      %p155 = scmp.ne.s32.totalorder %s147, %s149
      %p156 = scmp.eq.s32.totalorder %s29, 1
      %p157 = por %p155, %p156
      %p158 = scmp.ne.s32.totalorder %s149, %s150
      %p159 = scmp.eq.s32.totalorder %s29, 0
      %p160 = por %p158, %p159
      %p161 = scmp.ne.s32.totalorder %s149, %s150
      %p162 = scmp.eq.s32.totalorder %s30, 1
      %p163 = por %p161, %p162
      %p165 = scmp.ne.s32.totalorder %s150, %s164
      %p166 = scmp.eq.s32.totalorder %s30, 0
      %p167 = por %p165, %p166
      %s169 = sadd.s32 %s168, 1
      %p172 = scmp.eq.s32.totalorder %s24, 1
      %p173 = scmp.ne.s32.totalorder %s168, %s170
      %p174 = scmp.eq.s32.totalorder %s24, 0
      %p175 = por %p173, %p174
      %p176 = scmp.ne.s32.totalorder %s168, %s170
      %p177 = scmp.eq.s32.totalorder %s29, 1
      %p178 = por %p176, %p177
      %p179 = scmp.ne.s32.totalorder %s170, %s171
      %p180 = scmp.eq.s32.totalorder %s29, 0
      %p181 = por %p179, %p180
      %p182 = scmp.ne.s32.totalorder %s170, %s171
      %p183 = scmp.eq.s32.totalorder %s30, 1
      %p184 = por %p182, %p183
      %p186 = scmp.ne.s32.totalorder %s171, %s185
      %p187 = scmp.eq.s32.totalorder %s30, 0
      %p188 = por %p186, %p187
      %s189 = ssub.s32 %s24, %s31
      %p190 = scmp.eq.s32.totalorder %s189, 0
      %s192 = sadd.s32 %s191, 1
      %s193 = scalar_select %p190, %s191, %s192
      %p196 = pneg %p190
      %p197 = scmp.eq.s32.totalorder %s24, 1
      %p198 = por %p196, %p197
      %p199 = scmp.ne.s32.totalorder %s191, %s194
      %p200 = scmp.eq.s32.totalorder %s24, 0
      %p201 = por %p199, %p200
      %p202 = scmp.ne.s32.totalorder %s191, %s194
      %p203 = scmp.eq.s32.totalorder %s29, 1
      %p204 = por %p202, %p203
      %p205 = scmp.ne.s32.totalorder %s194, %s195
      %p206 = scmp.eq.s32.totalorder %s29, 0
      %p207 = por %p205, %p206
      %p208 = scmp.ne.s32.totalorder %s194, %s195
      %p209 = scmp.eq.s32.totalorder %s30, 1
      %p210 = por %p208, %p209
      %p212 = scmp.ne.s32.totalorder %s195, %s211
      %p213 = scmp.eq.s32.totalorder %s30, 0
      %p214 = por %p212, %p213
      %p215 = scmp.le.s32.totalorder 1, %s24
      %p216 = scmp.lt.s32.totalorder %s24, 3
      %p217 = pnand %p215, %p216
      %p218 = pneg %p217
      // Predicated region
      $region9: #{tpu_custom_call.1} parent=5 // pred_check
        _
      $region10: #{tpu_custom_call.1} parent=5 // pred_check_branch
        %220 = sbr.rel (%p217) target = $region12
      $region11: #{tpu_custom_call.1} parent=5 // pred_region
        %s221 = ssub.s32 %s24, 1
        // Predicated region
        $region13: #{tpu_custom_call.1} parent=11 // pred_check
          %p222 = pneg %p97
        $region14: #{tpu_custom_call.1} parent=11 // pred_check_branch
          %224 = sbr.rel (%p222) target = $region16
        $region15: #{tpu_custom_call.1} parent=11 // pred_region
          %s226 = ssub.s32 256, 256
          %227 = vsyncadd [#allocation6], %s226
          %s228 = sshll.u32 [#allocation7], 4
          %s229 = int_to_ptr.vmem [resolvable:$true] %s228
          %234 = dma.hbm_to_vmem [thread:$0]  %s2, 256, %s229, [#allocation6], 64, 64, 4
        $region16: #{tpu_custom_call.1} parent=11 // pred_fallthru
          _
        // Predicated region
        $region17: #{tpu_custom_call.1} parent=11 // pred_check
          %p235 = pneg %p118
        $region18: #{tpu_custom_call.1} parent=11 // pred_check_branch
          %237 = sbr.rel (%p235) target = $region20
        $region19: #{tpu_custom_call.1} parent=11 // pred_region
          %s239 = ssub.s32 768, 768
          %240 = vsyncadd [#allocation9], %s239
          %s241 = sshll.u32 [#allocation8], 4
          %s242 = int_to_ptr.vmem [resolvable:$true] %s241
          %247 = dma.hbm_to_vmem [thread:$0]  %s3, 768, %s242, [#allocation9], 64, 64, 4
        $region20: #{tpu_custom_call.1} parent=11 // pred_fallthru
          _
        // Predicated region
        $region21: #{tpu_custom_call.1} parent=11 // pred_check
          %p248 = pneg %p139
        $region22: #{tpu_custom_call.1} parent=11 // pred_check_branch
          %250 = sbr.rel (%p248) target = $region24
        $region23: #{tpu_custom_call.1} parent=11 // pred_region
          %s252 = ssub.s32 256, 256
          %253 = vsyncadd [#allocation9], %s252
          %s254 = sshll.u32 [#allocation10], 4
          %s255 = int_to_ptr.vmem [resolvable:$true] %s254
          %260 = dma.hbm_to_vmem [thread:$0]  %s4, 256, %s255, [#allocation9], 64, 64, 4
        $region24: #{tpu_custom_call.1} parent=11 // pred_fallthru
          _
        // Predicated region
        $region25: #{tpu_custom_call.1} parent=11 // pred_check
          %p261 = pneg %p160
        $region26: #{tpu_custom_call.1} parent=11 // pred_check_branch
          %263 = sbr.rel (%p261) target = $region28
        $region27: #{tpu_custom_call.1} parent=11 // pred_region
          _
        $region28: #{tpu_custom_call.1} parent=11 // pred_fallthru
          _
        // Predicated region
        $region29: #{tpu_custom_call.1} parent=11 // pred_check
          %p264 = pneg %p181
        $region30: #{tpu_custom_call.1} parent=11 // pred_check_branch
          %266 = sbr.rel (%p264) target = $region32
        $region31: #{tpu_custom_call.1} parent=11 // pred_region
          %s268 = ssub.s32 256, 256
          %269 = vsyncadd [#allocation12], %s268
          %s270 = sshll.u32 [#allocation11], 4
          %s271 = int_to_ptr.vmem [resolvable:$true] %s270
          %276 = dma.hbm_to_vmem [thread:$0]  %s6, 256, %s271, [#allocation12], 64, 64, 4
        $region32: #{tpu_custom_call.1} parent=11 // pred_fallthru
          _
      $region12: #{tpu_custom_call.1} parent=5 // pred_fallthru
        _
      %p277 = scmp.lt.s32.totalorder %s24, 2
      // Predicated region
      $region33: #{tpu_custom_call.1} parent=5 // pred_check
        %p278 = pneg %p277
      $region34: #{tpu_custom_call.1} parent=5 // pred_check_branch
        %280 = sbr.rel (%p278) target = $region36
      $region35: #{tpu_custom_call.1} parent=5 // pred_region
        // Predicated region
        $region37: #{tpu_custom_call.1} parent=35 // pred_check
          %p281 = pneg %p44
        $region38: #{tpu_custom_call.1} parent=35 // pred_check_branch
          %283 = sbr.rel (%p281) target = $region40
        $region39: #{tpu_custom_call.1} parent=35 // pred_region
          %s284 = sand.u32 %s34, 1
          %s285 = scalar_lea.sflag [#allocation3], %s284
          %s286 = sand.u32 %s34, 1
          %s287 = smul.addr %s286, 4
          %s288 = scalar_lea.vmem [#allocation2], %s287
          %s290 = ssub.s32 64, 64
          %291 = vsyncadd %s285, %s290
          %s292 = smul.addr %s24, 64
          %s293 = scalar_lea.hbm %s0, %s292
          %s295 = sshll.u32 %s288, 4
          %s296 = int_to_ptr.vmem [resolvable:$true] %s295
          %298 = dma.hbm_to_vmem [thread:$0]  %s293, 64, %s296, %s285
        $region40: #{tpu_custom_call.1} parent=35 // pred_fallthru
          _
        // Predicated region
        $region41: #{tpu_custom_call.1} parent=35 // pred_check
          %p299 = pneg %p70
        $region42: #{tpu_custom_call.1} parent=35 // pred_check_branch
          %301 = sbr.rel (%p299) target = $region44
        $region43: #{tpu_custom_call.1} parent=35 // pred_region
          %s302 = sand.u32 %s24, 1
          %s303 = scalar_lea.sflag [#allocation6], %s302
          %s304 = sand.u32 %s60, 1
          %s305 = smul.addr %s304, 12
          %s306 = scalar_lea.vmem [#allocation5], %s305
          %s308 = ssub.s32 192, 192
          %309 = vsyncadd %s303, %s308
          %s310 = smul.addr %s24, 64
          %s311 = scalar_lea.hbm %s1, %s310
          %s312 = sshll.u32 %s306, 4
          %s313 = int_to_ptr.vmem [resolvable:$true] %s312
          %318 = dma.hbm_to_vmem [thread:$0]  %s311, 192, %s313, %s303, 128, 64, 4
        $region44: #{tpu_custom_call.1} parent=35 // pred_fallthru
          _
      $region36: #{tpu_custom_call.1} parent=5 // pred_fallthru
        _
      %p319 = scmp.le.s32.totalorder 1, %s24
      %p320 = scmp.lt.s32.totalorder %s24, 3
      %p321 = pnand %p319, %p320
      %p322 = pneg %p321
      // Predicated region
      $region45: #{tpu_custom_call.1} parent=5 // pred_check
        _
      $region46: #{tpu_custom_call.1} parent=5 // pred_check_branch
        %324 = sbr.rel (%p321) target = $region48
      $region47: #{tpu_custom_call.1} parent=5 // pred_region
        %s325 = ssub.s32 %s24, 1
        %s326 = sand.u32 %s37, 1
        %s327 = scalar_lea.sflag [#allocation3], %s326
        %s328 = sand.u32 %s37, 1
        %s329 = smul.addr %s328, 4
        %s330 = scalar_lea.vmem [#allocation2], %s329
        // Predicated region
        $region49: #{tpu_custom_call.1} parent=47 // pred_check
          %p331 = pneg %p50
        $region50: #{tpu_custom_call.1} parent=47 // pred_check_branch
          %333 = sbr.rel (%p331) target = $region52
        $region51: #{tpu_custom_call.1} parent=47 // pred_region
          %334 = dma.done %s327, 64
        $region52: #{tpu_custom_call.1} parent=47 // pred_fallthru
          _
        %s335 = sand.u32 %s29, 1
        %s336 = scalar_lea.sflag [#allocation6], %s335
        %s337 = sand.u32 %s63, 1
        %s338 = smul.addr %s337, 12
        %s339 = scalar_lea.vmem [#allocation5], %s338
        // Predicated region
        $region53: #{tpu_custom_call.1} parent=47 // pred_check
          %p340 = pneg %p76
        $region54: #{tpu_custom_call.1} parent=47 // pred_check_branch
          %342 = sbr.rel (%p340) target = $region56
        $region55: #{tpu_custom_call.1} parent=47 // pred_region
          %343 = dma.done %s336, 192
        $region56: #{tpu_custom_call.1} parent=47 // pred_fallthru
          _
        // Predicated region
        $region57: #{tpu_custom_call.1} parent=47 // pred_check
          %p344 = pneg %p97
        $region58: #{tpu_custom_call.1} parent=47 // pred_check_branch
          %346 = sbr.rel (%p344) target = $region60
        $region59: #{tpu_custom_call.1} parent=47 // pred_region
          %347 = dma.done [#allocation6], 256
        $region60: #{tpu_custom_call.1} parent=47 // pred_fallthru
          _
        // Predicated region
        $region61: #{tpu_custom_call.1} parent=47 // pred_check
          %p348 = pneg %p118
        $region62: #{tpu_custom_call.1} parent=47 // pred_check_branch
          %350 = sbr.rel (%p348) target = $region64
        $region63: #{tpu_custom_call.1} parent=47 // pred_region
          %351 = dma.done [#allocation9], 768
        $region64: #{tpu_custom_call.1} parent=47 // pred_fallthru
          _
        // Predicated region
        $region65: #{tpu_custom_call.1} parent=47 // pred_check
          %p352 = pneg %p139
        $region66: #{tpu_custom_call.1} parent=47 // pred_check_branch
          %354 = sbr.rel (%p352) target = $region68
        $region67: #{tpu_custom_call.1} parent=47 // pred_region
          %355 = dma.done [#allocation9], 256
        $region68: #{tpu_custom_call.1} parent=47 // pred_fallthru
          _
        // Predicated region
        $region69: #{tpu_custom_call.1} parent=47 // pred_check
          %p356 = pneg %p181
        $region70: #{tpu_custom_call.1} parent=47 // pred_check_branch
          %358 = sbr.rel (%p356) target = $region72
        $region71: #{tpu_custom_call.1} parent=47 // pred_region
          %359 = dma.done [#allocation12], 256
        $region72: #{tpu_custom_call.1} parent=47 // pred_fallthru
          _
        %s360 = sand.u32 %s37, 1
        %s361 = scalar_lea.sflag [#allocation3], %s360
        %s362 = sand.u32 %s37, 1
        %s363 = smul.addr %s362, 4
        %s364 = scalar_lea.vmem [#allocation2], %s363
        %p365 = pneg %p50
        %p366 = pneg %p47
        %s367 = sand.u32 %s29, 1
        %s368 = scalar_lea.sflag [#allocation6], %s367
        %s369 = sand.u32 %s63, 1
        %s370 = smul.addr %s369, 12
        %s371 = scalar_lea.vmem [#allocation5], %s370
        %p372 = pneg %p76
        %p373 = pneg %p73
        %p374 = pneg %p97
        %p375 = pneg %p94
        %p376 = pneg %p118
        %p377 = pneg %p115
        %p378 = pneg %p139
        %p379 = pneg %p136
        %p380 = pneg %p160
        %p381 = pneg %p157
        %p382 = pneg %p181
        %p383 = pneg %p178
        %p384 = pneg %p207
        %p385 = pneg %p204
        %s386 = sand.u32 %s194, 1
        %s387 = scalar_lea.sflag [#allocation4], %s386
        %s388 = sand.u32 %s194, 1
        %s389 = smul.addr %s388, 8
        %s390 = scalar_lea.vmem [#allocation13], %s389
        %v392 = vld [vmem:[%s330] sm:$0xf]
        %v393 = vld [vmem:[%s339] sm:$0xf]
        %v394 = vld [vmem:[%s339 + $0x4] sm:$0xf]
        %v395 = vld [vmem:[%s339 + $0x8] sm:$0xf]
        %v396 = vld [vmem:[#allocation7] sm:$0xf]
        %v397 = vld [vmem:[#allocation7 + $0x4] sm:$0xf]
        %v398 = vld [vmem:[#allocation7 + $0x8] sm:$0xf]
        %v399 = vld [vmem:[#allocation7 + $0xc] sm:$0xf]
        %v404 = vunpack.c.l.b16 %v396
        %v405 = vunpack.c.l.b16 %v397
        %v406 = vunpack.c.l.b16 %v398
        %v407 = vunpack.c.l.b16 %v399
        %v408 = vpack.c.b16 %v405, %v404
        %v409 = vpack.c.b16 %v407, %v406
        %vm412 = vcmask 261120
        %v414 = vsel %vm412, %v392, 0
        %416 = vmatprep.subr.bf16.mxu0 0
        %417 = vmatpush1.bf16.msra.mxu0 %v408
        %418 = vmatprep.subr.bf16.mxu0 0
        %419 = vmatpush1.bf16.msra.mxu0 %v409
        %420 = vmatprep.subr.bf16.mxu0 0
        %421 = vmatpush1.bf16.msra.mxu0 0
        %422 = vmatprep.subr.bf16.mxu0 0
        %423 = vmatpush1.bf16.msra.mxu0 0
        %424 = vmatprep.subr.bf16.mxu0 0
        %425 = vmatpush1.bf16.msra.mxu0 0
        %426 = vmatprep.subr.bf16.mxu0 0
        %427 = vmatpush1.bf16.msra.mxu0 0
        %428 = vmatprep.subr.bf16.mxu0 0
        %429 = vmatpush1.bf16.msra.mxu0 0
        %430 = vmatprep.subr.bf16.mxu0 0
        %431 = vmatpush1.bf16.msra.mxu0 0
        %432 = vmatprep.subr.bf16.mxu0 0
        %433 = vmatpush1.bf16.msra.mxu0 0
        %434 = vmatprep.subr.bf16.mxu0 0
        %435 = vmatpush1.bf16.msra.mxu0 0
        %436 = vmatprep.subr.bf16.mxu0 0
        %437 = vmatpush1.bf16.msra.mxu0 0
        %438 = vmatprep.subr.bf16.mxu0 0
        %439 = vmatpush1.bf16.msra.mxu0 0
        %440 = vmatprep.subr.bf16.mxu0 0
        %441 = vmatpush1.bf16.msra.mxu0 0
        %442 = vmatprep.subr.bf16.mxu0 0
        %443 = vmatpush1.bf16.msra.mxu0 0
        %444 = vmatprep.subr.bf16.mxu0 0
        %445 = vmatpush1.bf16.msra.mxu0 0
        %446 = vmatprep.subr.bf16.mxu0 0
        %447 = vmatpush1.bf16.msra.mxu0 0
        %448 = vmatprep.mubr.bf16.mxu0 0
        %449 = vmatmul.mubr.bf16.gmra.mrb[0].mxu0 %v414
        %v450 = vpop.f32.mrb[0].mxu0
        %v451 = vadd.f32 0.0, %v450
        %v452 = vpop.f32.mrb[0].mxu0
        %v453 = vpop.f32.mrb[0].mxu0
        %v454 = vpop.f32.mrb[0].mxu0
        %455 = vdwg.mxu0
        %v456 = vmax.f32 %v451, 0.0
        %v457 = vld [vmem:[#allocation8] sm:$0xf]
        %v458 = vld [vmem:[#allocation8 + $0x4] sm:$0xf]
        %v459 = vld [vmem:[#allocation8 + $0x8] sm:$0xf]
        %v460 = vld [vmem:[#allocation8 + $0xc] sm:$0xf]
        %v461 = vld [vmem:[#allocation8 + $0x10] sm:$0xf]
        %v462 = vld [vmem:[#allocation8 + $0x14] sm:$0xf]
        %v463 = vld [vmem:[#allocation8 + $0x18] sm:$0xf]
        %v464 = vld [vmem:[#allocation8 + $0x1c] sm:$0xf]
        %v465 = vld [vmem:[#allocation8 + $0x20] sm:$0xf]
        %v466 = vld [vmem:[#allocation8 + $0x24] sm:$0xf]
        %v467 = vld [vmem:[#allocation8 + $0x28] sm:$0xf]
        %v468 = vld [vmem:[#allocation8 + $0x2c] sm:$0xf]
        %v473 = vunpack.c.l.b16 %v457
        %v474 = vunpack.c.l.b16 %v458
        %v475 = vunpack.c.l.b16 %v459
        %v476 = vunpack.c.l.b16 %v460
        %v477 = vpack.c.b16 %v474, %v473
        %v478 = vpack.c.b16 %v476, %v475
        %v482 = vsel %vm412, %v393, 0
        %484 = vmatprep.subr.bf16.mxu0 0
        %485 = vmatpush1.bf16.msra.mxu0 %v477
        %486 = vmatprep.subr.bf16.mxu0 0
        %487 = vmatpush1.bf16.msra.mxu0 %v478
        %488 = vmatprep.subr.bf16.mxu0 0
        %489 = vmatpush1.bf16.msra.mxu0 0
        %490 = vmatprep.subr.bf16.mxu0 0
        %491 = vmatpush1.bf16.msra.mxu0 0
        %492 = vmatprep.subr.bf16.mxu0 0
        %493 = vmatpush1.bf16.msra.mxu0 0
        %494 = vmatprep.subr.bf16.mxu0 0
        %495 = vmatpush1.bf16.msra.mxu0 0
        %496 = vmatprep.subr.bf16.mxu0 0
        %497 = vmatpush1.bf16.msra.mxu0 0
        %498 = vmatprep.subr.bf16.mxu0 0
        %499 = vmatpush1.bf16.msra.mxu0 0
        %500 = vmatprep.subr.bf16.mxu0 0
        %501 = vmatpush1.bf16.msra.mxu0 0
        %502 = vmatprep.subr.bf16.mxu0 0
        %503 = vmatpush1.bf16.msra.mxu0 0
        %504 = vmatprep.subr.bf16.mxu0 0
        %505 = vmatpush1.bf16.msra.mxu0 0
        %506 = vmatprep.subr.bf16.mxu0 0
        %507 = vmatpush1.bf16.msra.mxu0 0
        %508 = vmatprep.subr.bf16.mxu0 0
        %509 = vmatpush1.bf16.msra.mxu0 0
        %510 = vmatprep.subr.bf16.mxu0 0
        %511 = vmatpush1.bf16.msra.mxu0 0
        %512 = vmatprep.subr.bf16.mxu0 0
        %513 = vmatpush1.bf16.msra.mxu0 0
        %514 = vmatprep.subr.bf16.mxu0 0
        %515 = vmatpush1.bf16.msra.mxu0 0
        %516 = vmatprep.mubr.bf16.mxu0 0
        %517 = vmatmul.mubr.bf16.gmra.mrb[0].mxu0 %v482
        %v518 = vpop.f32.mrb[0].mxu0
        %v519 = vadd.f32 0.0, %v518
        %v520 = vpop.f32.mrb[0].mxu0
        %v521 = vpop.f32.mrb[0].mxu0
        %v522 = vpop.f32.mrb[0].mxu0
        %523 = vdwg.mxu0
        %v528 = vunpack.c.l.b16 %v461
        %v529 = vunpack.c.l.b16 %v462
        %v530 = vunpack.c.l.b16 %v463
        %v531 = vunpack.c.l.b16 %v464
        %v532 = vpack.c.b16 %v529, %v528
        %v533 = vpack.c.b16 %v531, %v530
        %v537 = vsel %vm412, %v394, 0
        %539 = vmatprep.subr.bf16.mxu0 0
        %540 = vmatpush1.bf16.msra.mxu0 %v532
        %541 = vmatprep.subr.bf16.mxu0 0
        %542 = vmatpush1.bf16.msra.mxu0 %v533
        %543 = vmatprep.subr.bf16.mxu0 0
        %544 = vmatpush1.bf16.msra.mxu0 0
        %545 = vmatprep.subr.bf16.mxu0 0
        %546 = vmatpush1.bf16.msra.mxu0 0
        %547 = vmatprep.subr.bf16.mxu0 0
        %548 = vmatpush1.bf16.msra.mxu0 0
        %549 = vmatprep.subr.bf16.mxu0 0
        %550 = vmatpush1.bf16.msra.mxu0 0
        %551 = vmatprep.subr.bf16.mxu0 0
        %552 = vmatpush1.bf16.msra.mxu0 0
        %553 = vmatprep.subr.bf16.mxu0 0
        %554 = vmatpush1.bf16.msra.mxu0 0
        %555 = vmatprep.subr.bf16.mxu0 0
        %556 = vmatpush1.bf16.msra.mxu0 0
        %557 = vmatprep.subr.bf16.mxu0 0
        %558 = vmatpush1.bf16.msra.mxu0 0
        %559 = vmatprep.subr.bf16.mxu0 0
        %560 = vmatpush1.bf16.msra.mxu0 0
        %561 = vmatprep.subr.bf16.mxu0 0
        %562 = vmatpush1.bf16.msra.mxu0 0
        %563 = vmatprep.subr.bf16.mxu0 0
        %564 = vmatpush1.bf16.msra.mxu0 0
        %565 = vmatprep.subr.bf16.mxu0 0
        %566 = vmatpush1.bf16.msra.mxu0 0
        %567 = vmatprep.subr.bf16.mxu0 0
        %568 = vmatpush1.bf16.msra.mxu0 0
        %569 = vmatprep.subr.bf16.mxu0 0
        %570 = vmatpush1.bf16.msra.mxu0 0
        %571 = vmatprep.mubr.bf16.mxu0 0
        %572 = vmatmul.mubr.bf16.gmra.mrb[0].mxu0 %v537
        %v573 = vpop.f32.mrb[0].mxu0
        %v574 = vadd.f32 0.0, %v573
        %v575 = vpop.f32.mrb[0].mxu0
        %v576 = vpop.f32.mrb[0].mxu0
        %v577 = vpop.f32.mrb[0].mxu0
        %578 = vdwg.mxu0
        %v583 = vunpack.c.l.b16 %v465
        %v584 = vunpack.c.l.b16 %v466
        %v585 = vunpack.c.l.b16 %v467
        %v586 = vunpack.c.l.b16 %v468
        %v587 = vpack.c.b16 %v584, %v583
        %v588 = vpack.c.b16 %v586, %v585
        %v592 = vsel %vm412, %v395, 0
        %594 = vmatprep.subr.bf16.mxu0 0
        %595 = vmatpush1.bf16.msra.mxu0 %v587
        %596 = vmatprep.subr.bf16.mxu0 0
        %597 = vmatpush1.bf16.msra.mxu0 %v588
        %598 = vmatprep.subr.bf16.mxu0 0
        %599 = vmatpush1.bf16.msra.mxu0 0
        %600 = vmatprep.subr.bf16.mxu0 0
        %601 = vmatpush1.bf16.msra.mxu0 0
        %602 = vmatprep.subr.bf16.mxu0 0
        %603 = vmatpush1.bf16.msra.mxu0 0
        %604 = vmatprep.subr.bf16.mxu0 0
        %605 = vmatpush1.bf16.msra.mxu0 0
        %606 = vmatprep.subr.bf16.mxu0 0
        %607 = vmatpush1.bf16.msra.mxu0 0
        %608 = vmatprep.subr.bf16.mxu0 0
        %609 = vmatpush1.bf16.msra.mxu0 0
        %610 = vmatprep.subr.bf16.mxu0 0
        %611 = vmatpush1.bf16.msra.mxu0 0
        %612 = vmatprep.subr.bf16.mxu0 0
        %613 = vmatpush1.bf16.msra.mxu0 0
        %614 = vmatprep.subr.bf16.mxu0 0
        %615 = vmatpush1.bf16.msra.mxu0 0
        %616 = vmatprep.subr.bf16.mxu0 0
        %617 = vmatpush1.bf16.msra.mxu0 0
        %618 = vmatprep.subr.bf16.mxu0 0
        %619 = vmatpush1.bf16.msra.mxu0 0
        %620 = vmatprep.subr.bf16.mxu0 0
        %621 = vmatpush1.bf16.msra.mxu0 0
        %622 = vmatprep.subr.bf16.mxu0 0
        %623 = vmatpush1.bf16.msra.mxu0 0
        %624 = vmatprep.subr.bf16.mxu0 0
        %625 = vmatpush1.bf16.msra.mxu0 0
        %626 = vmatprep.mubr.bf16.mxu0 0
        %627 = vmatmul.mubr.bf16.gmra.mrb[0].mxu0 %v592
        %v628 = vpop.f32.mrb[0].mxu0
        %v629 = vadd.f32 0.0, %v628
        %v630 = vpop.f32.mrb[0].mxu0
        %v631 = vpop.f32.mrb[0].mxu0
        %v632 = vpop.f32.mrb[0].mxu0
        %633 = vdwg.mxu0
        %v634 = vmax.f32 %v519, 0.0
        %v635 = vmax.f32 %v574, 0.0
        %v636 = vmax.f32 %v629, 0.0
        %v637 = vpack.c.bf16 %v635, %v634
        %v638 = vpack.c.bf16 %v636, %v636
        %v639 = vld [vmem:[%s5] sm:$0xf]
        %v640 = vld [vmem:[%s5 + $0x4] sm:$0xf]
        %v641 = vld [vmem:[%s5 + $0x8] sm:$0xf]
        %v642 = vld [vmem:[%s5 + $0xc] sm:$0xf]
        %v647 = vunpack.c.l.b16 %v639
        %v648 = vunpack.c.l.b16 %v640
        %v649 = vunpack.c.l.b16 %v641
        %v650 = vunpack.c.l.b16 %v642
        %v651 = vpack.c.b16 %v648, %v647
        %v652 = vpack.c.b16 %v650, %v649
        %v656 = vsel %vm412, %v637, 0
        %v659 = vsel %vm412, %v638, 0
        %661 = vmatprep.subr.bf16.mxu0 0
        %662 = vmatpush1.bf16.msra.mxu0 %v651
        %663 = vmatprep.subr.bf16.mxu0 0
        %664 = vmatpush1.bf16.msra.mxu0 %v652
        %665 = vmatprep.subr.bf16.mxu0 0
        %666 = vmatpush1.bf16.msra.mxu0 0
        %667 = vmatprep.subr.bf16.mxu0 0
        %668 = vmatpush1.bf16.msra.mxu0 0
        %669 = vmatprep.subr.bf16.mxu0 0
        %670 = vmatpush1.bf16.msra.mxu0 0
        %671 = vmatprep.subr.bf16.mxu0 0
        %672 = vmatpush1.bf16.msra.mxu0 0
        %673 = vmatprep.subr.bf16.mxu0 0
        %674 = vmatpush1.bf16.msra.mxu0 0
        %675 = vmatprep.subr.bf16.mxu0 0
        %676 = vmatpush1.bf16.msra.mxu0 0
        %677 = vmatprep.subr.bf16.mxu0 0
        %678 = vmatpush1.bf16.msra.mxu0 0
        %679 = vmatprep.subr.bf16.mxu0 0
        %680 = vmatpush1.bf16.msra.mxu0 0
        %681 = vmatprep.subr.bf16.mxu0 0
        %682 = vmatpush1.bf16.msra.mxu0 0
        %683 = vmatprep.subr.bf16.mxu0 0
        %684 = vmatpush1.bf16.msra.mxu0 0
        %685 = vmatprep.subr.bf16.mxu0 0
        %686 = vmatpush1.bf16.msra.mxu0 0
        %687 = vmatprep.subr.bf16.mxu0 0
        %688 = vmatpush1.bf16.msra.mxu0 0
        %689 = vmatprep.subr.bf16.mxu0 0
        %690 = vmatpush1.bf16.msra.mxu0 0
        %691 = vmatprep.subr.bf16.mxu0 0
        %692 = vmatpush1.bf16.msra.mxu0 0
        %693 = vmatprep.mubr.bf16.mxu0 0
        %694 = vmatmul.mubr.bf16.gmra.mrb[0].mxu0 %v656
        %v695 = vpop.f32.mrb[0].mxu0
        %v696 = vadd.f32 0.0, %v695
        %v697 = vpop.f32.mrb[0].mxu0
        %v698 = vpop.f32.mrb[0].mxu0
        %v699 = vadd.f32 0.0, %v698
        %v700 = vpop.f32.mrb[0].mxu0
        %701 = vmatprep.mubr.bf16.mxu0 0
        %702 = vmatmul.mubr.bf16.gmra.mrb[0].mxu0 %v659
        %v703 = vpop.f32.mrb[0].mxu0
        %v704 = vadd.f32 0.0, %v703
        %v705 = vpop.f32.mrb[0].mxu0
        %v706 = vpop.f32.mrb[0].mxu0
        %v707 = vpop.f32.mrb[0].mxu0
        %708 = vdwg.mxu0
        %v709 = vpack.c.bf16 %v456, %v456
        %v710 = vld [vmem:[#allocation10] sm:$0xf]
        %v711 = vld [vmem:[#allocation10 + $0x4] sm:$0xf]
        %v712 = vld [vmem:[#allocation10 + $0x8] sm:$0xf]
        %v713 = vld [vmem:[#allocation10 + $0xc] sm:$0xf]
        %v718 = vunpack.c.l.b16 %v710
        %v719 = vunpack.c.l.b16 %v711
        %v720 = vunpack.c.l.b16 %v712
        %v721 = vunpack.c.l.b16 %v713
        %v722 = vpack.c.b16 %v719, %v718
        %v723 = vpack.c.b16 %v721, %v720
        %v727 = vsel %vm412, %v709, 0
        %729 = vmatprep.subr.bf16.mxu0 0
        %730 = vmatpush1.bf16.msra.mxu0 %v722
        %731 = vmatprep.subr.bf16.mxu0 0
        %732 = vmatpush1.bf16.msra.mxu0 %v723
        %733 = vmatprep.subr.bf16.mxu0 0
        %734 = vmatpush1.bf16.msra.mxu0 0
        %735 = vmatprep.subr.bf16.mxu0 0
        %736 = vmatpush1.bf16.msra.mxu0 0
        %737 = vmatprep.subr.bf16.mxu0 0
        %738 = vmatpush1.bf16.msra.mxu0 0
        %739 = vmatprep.subr.bf16.mxu0 0
        %740 = vmatpush1.bf16.msra.mxu0 0
        %741 = vmatprep.subr.bf16.mxu0 0
        %742 = vmatpush1.bf16.msra.mxu0 0
        %743 = vmatprep.subr.bf16.mxu0 0
        %744 = vmatpush1.bf16.msra.mxu0 0
        %745 = vmatprep.subr.bf16.mxu0 0
        %746 = vmatpush1.bf16.msra.mxu0 0
        %747 = vmatprep.subr.bf16.mxu0 0
        %748 = vmatpush1.bf16.msra.mxu0 0
        %749 = vmatprep.subr.bf16.mxu0 0
        %750 = vmatpush1.bf16.msra.mxu0 0
        %751 = vmatprep.subr.bf16.mxu0 0
        %752 = vmatpush1.bf16.msra.mxu0 0
        %753 = vmatprep.subr.bf16.mxu0 0
        %754 = vmatpush1.bf16.msra.mxu0 0
        %755 = vmatprep.subr.bf16.mxu0 0
        %756 = vmatpush1.bf16.msra.mxu0 0
        %757 = vmatprep.subr.bf16.mxu0 0
        %758 = vmatpush1.bf16.msra.mxu0 0
        %759 = vmatprep.subr.bf16.mxu0 0
        %760 = vmatpush1.bf16.msra.mxu0 0
        %761 = vmatprep.mubr.bf16.mxu0 0
        %762 = vmatmul.mubr.bf16.gmra.mrb[0].mxu0 %v727
        %v763 = vpop.f32.mrb[0].mxu0
        %v764 = vadd.f32 0.0, %v763
        %v765 = vpop.f32.mrb[0].mxu0
        %v766 = vpop.f32.mrb[0].mxu0
        %v767 = vpop.f32.mrb[0].mxu0
        %768 = vdwg.mxu0
        %v769 = vadd.f32 %v696, %v764
        %v770 = vadd.f32 %v699, %v764
        %v771 = vadd.f32 %v704, %v764
        %v772 = vsel %vm412, %v769, -inf
        %v773 = vsel %vm412, %v770, -inf
        %v774 = vsel %vm412, %v771, -inf
        %v775 = vmax.f32 %v772, %v773
        %v776 = vmax.f32 %v775, %v774
        %v777 = vsub.f32 %v769, %v776
        %v778 = vsub.f32 %v770, %v776
        %v779 = vsub.f32 %v771, %v776
        %v780 = vmul.f32 %v777, 1.442695
        %v781 = vpow.pop %v780
        %v782 = vmul.f32 %v778, 1.442695
        %v783 = vpow.pop %v782
        %v784 = vmul.f32 %v779, 1.442695
        %v785 = vpow.pop %v784
        %v786 = vsel %vm412, %v781, 0.0
        %v787 = vsel %vm412, %v783, 0.0
        %v788 = vadd.f32 %v786, %v787
        %v789 = vsel %vm412, %v785, 0.0
        %v790 = vadd.f32 %v788, %v789
        %v791 = vunpack.c.l.bf16 %v393
        %v792 = vunpack.c.l.bf16 %v394
        %v793 = vunpack.c.l.bf16 %v395
        %v794 = vmul.f32 %v781, %v791
        %v795 = vmul.f32 %v783, %v792
        %v796 = vmul.f32 %v785, %v793
        %v797 = vsel %vm412, %v794, 0.0
        %v798 = vsel %vm412, %v795, 0.0
        %v799 = vadd.f32 %v797, %v798
        %v800 = vsel %vm412, %v796, 0.0
        %v801 = vadd.f32 %v799, %v800
        %v802 = vrcp.pop %v790
        %v803 = vmul.f32 %v801, %v802
        %v804 = vpack.c.bf16 %v803, %v803
        %v805 = vld [vmem:[#allocation11] sm:$0xf]
        %v806 = vld [vmem:[#allocation11 + $0x4] sm:$0xf]
        %v807 = vld [vmem:[#allocation11 + $0x8] sm:$0xf]
        %v808 = vld [vmem:[#allocation11 + $0xc] sm:$0xf]
        %v813 = vunpack.c.l.b16 %v805
        %v814 = vunpack.c.l.b16 %v806
        %v815 = vunpack.c.l.b16 %v807
        %v816 = vunpack.c.l.b16 %v808
        %v817 = vpack.c.b16 %v814, %v813
        %v818 = vpack.c.b16 %v816, %v815
        %v822 = vsel %vm412, %v804, 0
        %824 = vmatprep.subr.bf16.mxu0 0
        %825 = vmatpush1.bf16.msra.mxu0 %v817
        %826 = vmatprep.subr.bf16.mxu0 0
        %827 = vmatpush1.bf16.msra.mxu0 %v818
        %828 = vmatprep.subr.bf16.mxu0 0
        %829 = vmatpush1.bf16.msra.mxu0 0
        %830 = vmatprep.subr.bf16.mxu0 0
        %831 = vmatpush1.bf16.msra.mxu0 0
        %832 = vmatprep.subr.bf16.mxu0 0
        %833 = vmatpush1.bf16.msra.mxu0 0
        %834 = vmatprep.subr.bf16.mxu0 0
        %835 = vmatpush1.bf16.msra.mxu0 0
        %836 = vmatprep.subr.bf16.mxu0 0
        %837 = vmatpush1.bf16.msra.mxu0 0
        %838 = vmatprep.subr.bf16.mxu0 0
        %839 = vmatpush1.bf16.msra.mxu0 0
        %840 = vmatprep.subr.bf16.mxu0 0
        %841 = vmatpush1.bf16.msra.mxu0 0
        %842 = vmatprep.subr.bf16.mxu0 0
        %843 = vmatpush1.bf16.msra.mxu0 0
        %844 = vmatprep.subr.bf16.mxu0 0
        %845 = vmatpush1.bf16.msra.mxu0 0
        %846 = vmatprep.subr.bf16.mxu0 0
        %847 = vmatpush1.bf16.msra.mxu0 0
        %848 = vmatprep.subr.bf16.mxu0 0
        %849 = vmatpush1.bf16.msra.mxu0 0
        %850 = vmatprep.subr.bf16.mxu0 0
        %851 = vmatpush1.bf16.msra.mxu0 0
        %852 = vmatprep.subr.bf16.mxu0 0
        %853 = vmatpush1.bf16.msra.mxu0 0
        %854 = vmatprep.subr.bf16.mxu0 0
        %855 = vmatpush1.bf16.msra.mxu0 0
        %856 = vmatprep.mubr.bf16.mxu0 0
        %857 = vmatmul.mubr.bf16.gmra.mrb[0].mxu0 %v822
        %v858 = vpop.f32.mrb[0].mxu0
        %v859 = vadd.f32 0.0, %v858
        %v860 = vpop.f32.mrb[0].mxu0
        %v861 = vpop.f32.mrb[0].mxu0
        %v862 = vpop.f32.mrb[0].mxu0
        %863 = vdwg.mxu0
        %864 = vst.msk [vmem:[%s390] sm:$0xff] %vm412, %v859
        %s865 = sand.u32 %s194, 1
        %s866 = scalar_lea.sflag [#allocation4], %s865
        %s867 = sand.u32 %s194, 1
        %s868 = smul.addr %s867, 8
        %s869 = scalar_lea.vmem [#allocation13], %s868
        // Predicated region
        $region73: #{tpu_custom_call.1} parent=47 // pred_check
          %p870 = pneg %p204
        $region74: #{tpu_custom_call.1} parent=47 // pred_check_branch
          %872 = sbr.rel (%p870) target = $region76
        $region75: #{tpu_custom_call.1} parent=47 // pred_region
          %s874 = ssub.s32 128, 128
          %875 = vsyncadd %s866, %s874
          %s876 = smul.addr %s29, 128
          %s877 = scalar_lea.hbm %s7, %s876
          %s879 = sshll.u32 %s869, 4
          %s880 = int_to_ptr.vmem [resolvable:$true] %s879
          %882 = dma.vmem_to_hbm [thread:$0]  %s880, 128, %s877, %s866
        $region76: #{tpu_custom_call.1} parent=47 // pred_fallthru
          _
      $region48: #{tpu_custom_call.1} parent=5 // pred_fallthru
        _
      %p883 = scmp.le.s32.totalorder 2, %s24
      // Predicated region
      $region77: #{tpu_custom_call.1} parent=5 // pred_check
        %p884 = pneg %p883
      $region78: #{tpu_custom_call.1} parent=5 // pred_check_branch
        %886 = sbr.rel (%p884) target = $region80
      $region79: #{tpu_custom_call.1} parent=5 // pred_region
        %s887 = ssub.s32 %s24, 2
        // Predicated region
        $region81: #{tpu_custom_call.1} parent=79 // pred_check
          %p888 = pneg %p210
        $region82: #{tpu_custom_call.1} parent=79 // pred_check_branch
          %890 = sbr.rel (%p888) target = $region84
        $region83: #{tpu_custom_call.1} parent=79 // pred_region
          %s891 = sand.u32 %s195, 1
          %s892 = scalar_lea.sflag [#allocation4], %s891
          %s893 = sand.u32 %s195, 1
          %s894 = smul.addr %s893, 8
          %s895 = scalar_lea.vmem [#allocation13], %s894
          %896 = dma.done %s892, 128
        $region84: #{tpu_custom_call.1} parent=79 // pred_fallthru
          _
      $region80: #{tpu_custom_call.1} parent=5 // pred_fallthru
        _
    $region6: #{tpu_custom_call.1} parent=1 // loop_footer
      %s28 = sadd.s32 1, %s24
    $region7: #{tpu_custom_call.1} parent=1 // loop_footer_branch
      %23 = sbr.rel target = $region3
    $region8: #{tpu_custom_call.1} parent=1 // loop_exit
      _
    %897 = vsyncpa [#allocation3], 1
    %s898 = scalar_lea.sflag [#allocation3], 1
    %899 = vsyncpa %s898, 1
    %900 = vsyncpa [#allocation6], 1
    %s901 = scalar_lea.sflag [#allocation6], 1
    %902 = vsyncpa %s901, 1
    %903 = vsyncpa [#allocation9], 1
    %904 = vsyncpa [#allocation12], 1
    %905 = vsyncpa [#allocation4], 1
    %s906 = scalar_lea.sflag [#allocation4], 1
    %907 = vsyncpa %s906, 1

</llo_original>
